<compile_context>
chip_gen: v7x
topology: tpu7x:2x2x1
jax: 0.10.0
libtpu: 0.0.40
codegen_flags: <defaults>
</compile_context>

<pallas_src>
import jax
import jax.numpy as jnp
from jax.experimental import pallas as pl
from jax.experimental.pallas import tpu as pltpu


# ----------------------------------------------------------------------------
# Hardware-aware budgets
# ----------------------------------------------------------------------------
def _tpu_generation():
    """Best-effort TPU generation from device_kind ('TPU v5 lite', 'TPU v6e', ...)."""
    try:
        kind = jax.devices()[0].device_kind.lower()
    except Exception:
        return 0
    for g in (7, 6, 5, 4, 3, 2):
        if f"v{g}" in kind:
            return g
    return 0


def _vmem_budget():
    """Returns (vmem_limit_bytes, per_tile_budget_bytes).

    per_tile_budget covers ONE (tm, tn) input tile + its output tile
    (single-buffered); the double-buffering factor is already divided out, so
    the 4 pipelined slabs use ~40% of vmem_limit.
    """
    gen = _tpu_generation()
    try:
        cap = int(pltpu.get_tpu_info().vmem_capacity_bytes)
    except Exception:
        cap = (64 if gen >= 7 else 128) * 1024 * 1024
    vmem_limit = min(cap // 2, 64 * 1024 * 1024)      # 32 MiB on v7x, 64 MiB on v5e/v6e
    tile_budget = (vmem_limit * 2 // 5) // 2          # ~40% of limit / double-buffering
    return vmem_limit, tile_budget


# ----------------------------------------------------------------------------
# Kernels
# ----------------------------------------------------------------------------
def _scale_kernel_native(mask_ref, x_ref, o_ref):
    """out[tm, tn] = x[tm, tn] * mask[tm, 0], computed in the storage dtype."""
    o_ref[...] = x_ref[...] * mask_ref[...]


def _scale_kernel_f32(mask_ref, x_ref, o_ref):
    """Upconvert-in-vreg path (bf16 on chips without bf16 VALUs, other dtypes)."""
    o_ref[...] = (x_ref[...].astype(jnp.float32) * mask_ref[...]).astype(o_ref.dtype)


def _round_up(x, m):
    return ((x + m - 1) // m) * m


def _choose_tiles(bc, s, itemsize, tile_budget):
    """Pick (tm, tn): prefer tn == s (one contiguous DMA per block), shrink tm first."""
    pair = 2 * itemsize                                  # bytes/elem for in + out tile
    full_s_rows = tile_budget // max(1, s * pair)        # rows that fit with tn == s
    if full_s_rows >= 8 or s % 128 != 0 or s <= 128:
        # Full-extent lane axis.  Forced when s is not a multiple of 128 so we
        # never emit ragged (masked-vst) lane tails; at (8, s) this only
        # overshoots the budget for s ~> 400K elements, far above typical use.
        tn = s
        tm_cap = max(8, (full_s_rows // 8) * 8)
        tm = bc if bc <= tm_cap else tm_cap
    else:
        # Even an (8, s) slab is too big: split the lane axis at a 128-multiple cap.
        tn_cap = max(128, ((tile_budget // (8 * pair)) // 128) * 128)
        tn = s if s <= tn_cap else tn_cap
        rows = tile_budget // max(1, tn * pair)
        tm_cap = max(8, (rows // 8) * 8)
        tm = bc if bc <= tm_cap else tm_cap

    # Guarantee >= 2 grid steps along a parallel axis (v7x megacore sharding,
    # and so the pipeline has something to overlap).  Split rows first.
    if pl.cdiv(bc, tm) * pl.cdiv(s, tn) < 2:
        if bc > 8:
            tm = _round_up(pl.cdiv(bc, 2), 8)
        elif tn >= 256 and tn % 256 == 0:
            tn //= 2
        # else: genuinely tiny tensor; a single block is fine.
    return tm, tn


def _channel_scale(x2, mask2, donate_x=False):
    """x2: (b*c, s) float tensor;  mask2: (b*c, 1) f32 gate values."""
    bc, s = x2.shape
    itemsize = jnp.dtype(x2.dtype).itemsize
    vmem_limit, tile_budget = _vmem_budget()
    tm, tn = _choose_tiles(bc, s, itemsize, tile_budget)
    grid = (pl.cdiv(bc, tm), pl.cdiv(s, tn))             # lane axis iterates fastest

    # Native-dtype multiply when safe (f32 always; bf16 needs bf16 VALUs -> v6e+).
    gen = _tpu_generation()
    native = (x2.dtype == jnp.float32) or (x2.dtype == jnp.bfloat16 and gen >= 6)
    kernel = _scale_kernel_native if native else _scale_kernel_f32
    mask_slab = mask2.astype(x2.dtype) if native else mask2.astype(jnp.float32)

    return pl.pallas_call(
        kernel,
        grid=grid,
        in_specs=[
            # Mask slab: depends only on the row index -> not re-DMA'd across
            # consecutive lane-axis steps.  (tm, 1) last dim == full extent.
            pl.BlockSpec((tm, 1), lambda i, j: (i, 0)),
            pl.BlockSpec((tm, tn), lambda i, j: (i, j)),
        ],
        out_specs=pl.BlockSpec((tm, tn), lambda i, j: (i, j)),
        out_shape=jax.ShapeDtypeStruct((bc, s), x2.dtype),
        # Elementwise, same block index read/write -> aliasing is safe when the
        # caller does not reuse x afterwards (donation semantics).
        input_output_aliases=({1: 0} if donate_x else {}),
        compiler_params=pltpu.CompilerParams(
            dimension_semantics=("parallel", "parallel"),
            vmem_limit_bytes=int(vmem_limit)),
        cost_estimate=pl.CostEstimate(
            flops=bc * s,
            transcendentals=0,
            bytes_accessed=2 * bc * s * itemsize + bc * itemsize),
    )(mask_slab, x2)


# ----------------------------------------------------------------------------
# Gate MLP (tiny -> plain jnp) and module wrapper
# ----------------------------------------------------------------------------
def init_params(key, in_channels, squeeze_rate):
    """Deterministic parameter init matching HeadConv.__init__ shapes."""
    if in_channels < 80:
        squeeze_rate = squeeze_rate // 2
    hidden = in_channels // squeeze_rate
    k1, k2 = jax.random.split(key)
    # kaiming_normal_ (fan_in, relu): std = sqrt(2 / fan_in)
    fc1_w = jax.random.normal(k1, (hidden, in_channels), jnp.float32) * jnp.sqrt(
        2.0 / in_channels)
    fc2_w = jax.random.normal(k2, (in_channels, hidden), jnp.float32) * jnp.sqrt(
        2.0 / hidden)
    fc2_b = jnp.ones((in_channels,), jnp.float32)         # nn.init.constant_(bias, 1.0)
    return {"fc1_w": fc1_w, "fc2_w": fc2_w, "fc2_b": fc2_b}


def _gate_mask(xa, params, inactive_channels):
    """relu(fc2(relu(fc1(xa)))) with the lowest-k channels pruned.

    Matches torch semantics: clamp_max = topk(largest=False, k).max()
    == k-th smallest per row (ascending-sorted [k-1], duplicates included),
    then zero every entry <= clamp_max (ties at the threshold are also zeroed,
    as in the PyTorch reference).
    """
    h = jnp.maximum(jnp.dot(xa, params["fc1_w"].T,
                            preferred_element_type=jnp.float32), 0.0)
    m = jnp.maximum(jnp.dot(h, params["fc2_w"].T,
                            preferred_element_type=jnp.float32)
                    + params["fc2_b"][None, :], 0.0)
    if inactive_channels > 0:
        kth = jnp.sort(m, axis=1)[:, inactive_channels - 1][:, None]
        m = jnp.where(m <= kth, 0.0, m)
    return m


def head_conv_forward(x, x_averaged, inactive_channels, params, donate_x=False):
    """Pallas/JAX implementation of HeadConv.forward.

    x          : (b, c, d, h, w) float tensor (NCDHW, like PyTorch)
    x_averaged : any shape that views to (b, c)
    """
    b, c, d, h, w = x.shape
    inactive_channels = int(inactive_channels)
    assert 0 <= inactive_channels < c, "inactive_channels must be < num channels"

    xa = x_averaged.reshape(b, c).astype(jnp.float32)
    mask = _gate_mask(xa, params, inactive_channels)       # (b, c) f32

    # Hot path: broadcast multiply over the big activation tensor (Pallas).
    s = d * h * w
    x2 = x.reshape(b * c, s)
    mask2 = mask.reshape(b * c, 1)
    y2 = _channel_scale(x2, mask2, donate_x=donate_x)
    return y2.reshape(b, c, d, h, w)


# ----------------------------------------------------------------------------
# Demo / correctness check
# ----------------------------------------------------------------------------
if __name__ == "__main__":
    key = jax.random.PRNGKey(0)
    kx, kp = jax.random.split(key)

    # Small Conv3d-style 5-D input; spatial flattens to 4096 (multiple of 128),
    # row axis b*c = 32 -> full-s lane tiles, row axis split into >=2 blocks.
    b, c, d, h, w = 2, 16, 4, 8, 128
    in_channels = c
    squeeze_rate = 4            # in_channels < 80 -> //2 -> hidden = 8
    inactive_channels = 4

    x = jax.random.normal(kx, (b, c, d, h, w), jnp.float32)
    x_averaged = jnp.mean(x, axis=(2, 3, 4), keepdims=True)  # (b, c, 1, 1, 1)

    params = init_params(kp, in_channels, squeeze_rate)

    out = head_conv_forward(x, x_averaged, inactive_channels, params)
    jax.block_until_ready(out)

    # Pure-jnp reference check of the full forward.
    mask_ref = _gate_mask(x_averaged.reshape(b, c).astype(jnp.float32),
                          params, inactive_channels)
    ref = x * mask_ref.reshape(b, c, 1, 1, 1)
    assert out.shape == x.shape
    assert jnp.allclose(out, ref, atol=1e-6, rtol=1e-6)
    print("KERNEL_OK")
</pallas_src>

<mosaic_0001>
module attributes {stable_mosaic.version = 11 : i64} {
  func.func @_scale_kernel_native(%arg0: i32, %arg1: i32, %arg2: memref<16x1xf32, #tpu.memory_space<vmem>>, %arg3: memref<16x4096xf32, #tpu.memory_space<vmem>>, %arg4: memref<16x4096xf32, #tpu.memory_space<vmem>>) attributes {dimension_semantics = [#tpu.dimension_semantics<parallel>, #tpu.dimension_semantics<parallel>], iteration_bounds = array<i64: 2, 1>, scalar_prefetch = 0 : i64, scratch_operands = 0 : i64, tpu.core_type = #tpu.core_type<tc>, window_params = [{transform_indices = @transform_0, window_bounds = array<i64: 16, 1>}, {transform_indices = @transform_1, window_bounds = array<i64: 16, 4096>}, {transform_indices = @transform_2, window_bounds = array<i64: 16, 4096>}]} {
    %c0 = arith.constant 0 : index
    %c0_0 = arith.constant 0 : index
    %0 = vector.load %arg3[%c0, %c0_0] : memref<16x4096xf32, #tpu.memory_space<vmem>>, vector<16x4096xf32>
    %c0_1 = arith.constant 0 : index
    %c0_2 = arith.constant 0 : index
    %1 = vector.load %arg2[%c0_1, %c0_2] : memref<16x1xf32, #tpu.memory_space<vmem>>, vector<16x1xf32>
    %2 = vector.broadcast %1 : vector<16x1xf32> to vector<16x4096xf32>
    %3 = arith.mulf %0, %2 : vector<16x4096xf32>
    %c0_3 = arith.constant 0 : index
    %c0_4 = arith.constant 0 : index
    %4 = vector.load %arg4[%c0_3, %c0_4] : memref<16x4096xf32, #tpu.memory_space<vmem>>, vector<16x4096xf32>
    tpu.vector_store %arg4[%c0_3, %c0_4], %3 {strides = array<i32>} : memref<16x4096xf32, #tpu.memory_space<vmem>>, vector<16x4096xf32>,
    return
  }
  func.func @transform_0(%arg0: i32, %arg1: i32) -> (i32, i32) {
    %c0_i32 = arith.constant 0 : i32
    %c0_i32_0 = arith.constant 0 : i32
    return %arg0, %c0_i32 : i32, i32
  }
  func.func @transform_1(%arg0: i32, %arg1: i32) -> (i32, i32) {
    %c0_i32 = arith.constant 0 : i32
    return %arg0, %arg1 : i32, i32
  }
  func.func @transform_2(%arg0: i32, %arg1: i32) -> (i32, i32) {
    %c0_i32 = arith.constant 0 : i32
    return %arg0, %arg1 : i32, i32
  }
}

</mosaic_0001>

<llo_original>
// kernel: tpu_custom_call.1
$region0: #{tpu_custom_call.1}
  #allocation0 [shape = 'u32[]', space=smem, size = 0x4, offset = 0x4, fixed_abs, tag = 'smem constant byte address 0x4 - core index']
  #allocation1 [shape = 'u32[144,128]{1,0:T(1,128)}', space=vmem, size = 0x12000, scoped, tag = 'internal scratch']
  %s0 = inlined_call_operand.hbm [shape: f32[32,1], index: 0, kind: input, shape index: {}]
  %s1 = inlined_call_operand.hbm [shape: f32[32,4096], index: 1, kind: input, shape index: {}]
  %s2 = inlined_call_operand.hbm [shape: f32[32,4096], index: 2, kind: output, shape index: {}]
  %s3 = sld [smem:[#allocation0]]
  $region49: #{tpu_custom_call.1} parent=0
    _
  %s5 = ssub.s32 1, %s3
  %s6 = scalar_select 0, %s5, %s3
  $region1: #{tpu_custom_call.1} parent=0
    #allocation2 [shape = 'u8[16384]{0}', space=vmem, size = 0x4000, scoped, tag = 'input window, operand 0']
    #allocation3 [shape = 's32[2]{0}', space=sflag, size = 0x8, scoped, tag = 'scoped memory for tpu_custom_call.1']
    #allocation4 [shape = 's32[2]{0}', space=sflag, size = 0x8, scoped, tag = 'scoped memory for tpu_custom_call.1']
    #allocation5 [shape = 'u8[524288]{0}', space=vmem, size = 0x80000, scoped, tag = 'input window, operand 1']
    #allocation6 [shape = 's32[2]{0}', space=sflag, size = 0x8, scoped, tag = 'scoped memory for tpu_custom_call.1']
    #allocation7 [shape = 'u8[524288]{0}', space=vmem, size = 0x80000, scoped, tag = 'output window, operand 0']
    %7 = vsyncpa [#allocation3], 0
    %s8 = scalar_lea.sflag [#allocation3], 1
    %9 = vsyncpa %s8, 0
    %10 = vsyncpa [#allocation6], 0
    %s11 = scalar_lea.sflag [#allocation6], 1
    %12 = vsyncpa %s11, 0
    %13 = vsyncpa [#allocation4], 0
    %s14 = scalar_lea.sflag [#allocation4], 1
    %15 = vsyncpa %s14, 0
    loop: start=0, step=1, limit=4
    $region2: #{tpu_custom_call.1} parent=1 // loop_pre_header
      _
    $region3: #{tpu_custom_call.1} parent=1 // loop_header
      %s17 = sphi 0, %s21
      %p18 = scmp.ge.s32.totalorder %s17, 4
      %s24 = sphi 0, %s36
      %s25 = sphi 0, %s32
      %s26 = sphi 0, %s24
      %s27 = sphi 0, %s25
      %s28 = sphi 0, %s26
      %s29 = sphi 0, %s27
      %s39 = sphi 0, %s41
      %s42 = sphi 0, %s39
      %s43 = sphi 0, %s42
      %s59 = sphi 0, %s43
      %s67 = sphi 0, %s69
      %s70 = sphi 0, %s67
      %s71 = sphi 0, %s70
      %s87 = sphi 0, %s71
      %s95 = sphi 0, %s97
      %s98 = sphi 0, %s95
      %s99 = sphi 0, %s98
      %s115 = sphi 0, %s99
    $region4: #{tpu_custom_call.1} parent=1 // loop_header_branch
      %20 = sbr.rel (%p18) target = $region8
    $region5: #{tpu_custom_call.1} parent=1 // loop_body
      %s22 = ssub.s32 %s17, 1
      %s23 = ssub.s32 %s17, 2
      %s30 = sadd.s32 1, %s25
      %p31 = scmp.ge.s32.totalorder %s30, 1
      %s32 = scalar_select %p31, 0, %s30
      %s33 = sadd.s32 1, %s24
      %s34 = scalar_select %p31, %s33, %s24
      %p35 = scmp.ge.s32.totalorder %s34, 2
      %s36 = scalar_select %p35, 0, %s34
      %s37 = ssub.s32 %s24, %s36
      %p38 = scmp.eq.s32.totalorder %s37, 0
      %s40 = sadd.s32 %s39, 1
      %s41 = scalar_select %p38, %s39, %s40
      %p44 = pneg %p38
      %p45 = scmp.eq.s32.totalorder %s17, 1
      %p46 = por %p44, %p45
      %p47 = scmp.ne.s32.totalorder %s39, %s42
      %p48 = scmp.eq.s32.totalorder %s17, 0
      %p49 = por %p47, %p48
      %p50 = scmp.ne.s32.totalorder %s39, %s42
      %p51 = scmp.eq.s32.totalorder %s22, 1
      %p52 = por %p50, %p51
      %p53 = scmp.ne.s32.totalorder %s42, %s43
      %p54 = scmp.eq.s32.totalorder %s22, 0
      %p55 = por %p53, %p54
      %p56 = scmp.ne.s32.totalorder %s42, %s43
      %p57 = scmp.eq.s32.totalorder %s23, 1
      %p58 = por %p56, %p57
      %p60 = scmp.ne.s32.totalorder %s43, %s59
      %p61 = scmp.eq.s32.totalorder %s23, 0
      %p62 = por %p60, %p61
      %s63 = ssub.s32 %s24, %s36
      %s64 = ssub.s32 %s25, %s32
      %s65 = sor.u32 %s63, %s64
      %p66 = scmp.eq.s32.totalorder %s65, 0
      %s68 = sadd.s32 %s67, 1
      %s69 = scalar_select %p66, %s67, %s68
      %p72 = pneg %p66
      %p73 = scmp.eq.s32.totalorder %s17, 1
      %p74 = por %p72, %p73
      %p75 = scmp.ne.s32.totalorder %s67, %s70
      %p76 = scmp.eq.s32.totalorder %s17, 0
      %p77 = por %p75, %p76
      %p78 = scmp.ne.s32.totalorder %s67, %s70
      %p79 = scmp.eq.s32.totalorder %s22, 1
      %p80 = por %p78, %p79
      %p81 = scmp.ne.s32.totalorder %s70, %s71
      %p82 = scmp.eq.s32.totalorder %s22, 0
      %p83 = por %p81, %p82
      %p84 = scmp.ne.s32.totalorder %s70, %s71
      %p85 = scmp.eq.s32.totalorder %s23, 1
      %p86 = por %p84, %p85
      %p88 = scmp.ne.s32.totalorder %s71, %s87
      %p89 = scmp.eq.s32.totalorder %s23, 0
      %p90 = por %p88, %p89
      %s91 = ssub.s32 %s24, %s36
      %s92 = ssub.s32 %s25, %s32
      %s93 = sor.u32 %s91, %s92
      %p94 = scmp.eq.s32.totalorder %s93, 0
      %s96 = sadd.s32 %s95, 1
      %s97 = scalar_select %p94, %s95, %s96
      %p100 = pneg %p94
      %p101 = scmp.eq.s32.totalorder %s17, 1
      %p102 = por %p100, %p101
      %p103 = scmp.ne.s32.totalorder %s95, %s98
      %p104 = scmp.eq.s32.totalorder %s17, 0
      %p105 = por %p103, %p104
      %p106 = scmp.ne.s32.totalorder %s95, %s98
      %p107 = scmp.eq.s32.totalorder %s22, 1
      %p108 = por %p106, %p107
      %p109 = scmp.ne.s32.totalorder %s98, %s99
      %p110 = scmp.eq.s32.totalorder %s22, 0
      %p111 = por %p109, %p110
      %p112 = scmp.ne.s32.totalorder %s98, %s99
      %p113 = scmp.eq.s32.totalorder %s23, 1
      %p114 = por %p112, %p113
      %p116 = scmp.ne.s32.totalorder %s99, %s115
      %p117 = scmp.eq.s32.totalorder %s23, 0
      %p118 = por %p116, %p117
      %p119 = scmp.le.s32.totalorder 1, %s17
      %p120 = scmp.lt.s32.totalorder %s17, 3
      %p121 = pnand %p119, %p120
      %p122 = pneg %p121
      // Predicated region
      $region9: #{tpu_custom_call.1} parent=5 // pred_check
        _
      $region10: #{tpu_custom_call.1} parent=5 // pred_check_branch
        %124 = sbr.rel (%p121) target = $region12
      $region11: #{tpu_custom_call.1} parent=5 // pred_region
        %s125 = ssub.s32 %s17, 1
      $region12: #{tpu_custom_call.1} parent=5 // pred_fallthru
        _
      %p126 = scmp.lt.s32.totalorder %s17, 2
      // Predicated region
      $region13: #{tpu_custom_call.1} parent=5 // pred_check
        %p127 = pneg %p126
      $region14: #{tpu_custom_call.1} parent=5 // pred_check_branch
        %129 = sbr.rel (%p127) target = $region16
      $region15: #{tpu_custom_call.1} parent=5 // pred_region
        // Predicated region
        $region17: #{tpu_custom_call.1} parent=15 // pred_check
          %p130 = pneg %p49
        $region18: #{tpu_custom_call.1} parent=15 // pred_check_branch
          %132 = sbr.rel (%p130) target = $region20
        $region19: #{tpu_custom_call.1} parent=15 // pred_region
          %s133 = sand.u32 %s39, 1
          %s134 = scalar_lea.sflag [#allocation3], %s133
          %s135 = sand.u32 %s39, 1
          %s136 = smul.addr %s135, 16
          %s137 = scalar_lea.vmem [#allocation2], %s136
          %s138 = smul.u32 2, %s24
          %s140 = ssub.s32 256, 256
          %141 = vsyncadd %s134, %s140
          %s142 = smul.addr %s138, 128
          %s143 = scalar_lea.hbm %s0, %s142
          %s144 = sshll.u32 %s137, 4
          %s145 = int_to_ptr.vmem [resolvable:$true] %s144
          %150 = dma.hbm_to_vmem [thread:$0]  %s143, 256, %s145, %s134, 128, 128, 8
        $region20: #{tpu_custom_call.1} parent=15 // pred_fallthru
          _
        // Predicated region
        $region21: #{tpu_custom_call.1} parent=15 // pred_check
          %p151 = pneg %p77
        $region22: #{tpu_custom_call.1} parent=15 // pred_check_branch
          %153 = sbr.rel (%p151) target = $region24
        $region23: #{tpu_custom_call.1} parent=15 // pred_region
          %s154 = sand.u32 %s67, 1
          %s155 = scalar_lea.sflag [#allocation6], %s154
          %s156 = sand.u32 %s67, 1
          %s157 = smul.addr %s156, 512
          %s158 = scalar_lea.vmem [#allocation5], %s157
          %s159 = smul.u32 2, %s24
          %s160 = smul.u32 32, %s25
          %s162 = ssub.s32 8192, 8192
          %163 = vsyncadd %s155, %s162
          %s164 = smul.addr %s159, 32
          %s165 = sadd.s32 %s160, %s164
          %s166 = smul.addr %s165, 128
          %s167 = scalar_lea.hbm %s1, %s166
          %s168 = sshll.u32 %s158, 4
          %s169 = int_to_ptr.vmem [resolvable:$true] %s168
          %174 = dma.hbm_to_vmem [thread:$0]  %s167, 8192, %s169, %s155, 4096, 4096, 256
        $region24: #{tpu_custom_call.1} parent=15 // pred_fallthru
          _
      $region16: #{tpu_custom_call.1} parent=5 // pred_fallthru
        _
      %p175 = scmp.le.s32.totalorder 1, %s17
      %p176 = scmp.lt.s32.totalorder %s17, 3
      %p177 = pnand %p175, %p176
      %p178 = pneg %p177
      // Predicated region
      $region25: #{tpu_custom_call.1} parent=5 // pred_check
        _
      $region26: #{tpu_custom_call.1} parent=5 // pred_check_branch
        %180 = sbr.rel (%p177) target = $region28
      $region27: #{tpu_custom_call.1} parent=5 // pred_region
        %s181 = ssub.s32 %s17, 1
        %s182 = sand.u32 %s42, 1
        %s183 = scalar_lea.sflag [#allocation3], %s182
        %s184 = sand.u32 %s42, 1
        %s185 = smul.addr %s184, 16
        %s186 = scalar_lea.vmem [#allocation2], %s185
        // Predicated region
        $region29: #{tpu_custom_call.1} parent=27 // pred_check
          %p187 = pneg %p55
        $region30: #{tpu_custom_call.1} parent=27 // pred_check_branch
          %189 = sbr.rel (%p187) target = $region32
        $region31: #{tpu_custom_call.1} parent=27 // pred_region
          %190 = dma.done %s183, 256
        $region32: #{tpu_custom_call.1} parent=27 // pred_fallthru
          _
        %s191 = sand.u32 %s70, 1
        %s192 = scalar_lea.sflag [#allocation6], %s191
        %s193 = sand.u32 %s70, 1
        %s194 = smul.addr %s193, 512
        %s195 = scalar_lea.vmem [#allocation5], %s194
        // Predicated region
        $region33: #{tpu_custom_call.1} parent=27 // pred_check
          %p196 = pneg %p83
        $region34: #{tpu_custom_call.1} parent=27 // pred_check_branch
          %198 = sbr.rel (%p196) target = $region36
        $region35: #{tpu_custom_call.1} parent=27 // pred_region
          %199 = dma.done %s192, 8192
        $region36: #{tpu_custom_call.1} parent=27 // pred_fallthru
          _
        %s200 = sand.u32 %s42, 1
        %s201 = scalar_lea.sflag [#allocation3], %s200
        %s202 = sand.u32 %s42, 1
        %s203 = smul.addr %s202, 16
        %s204 = scalar_lea.vmem [#allocation2], %s203
        %p205 = pneg %p55
        %p206 = pneg %p52
        %s207 = sand.u32 %s70, 1
        %s208 = scalar_lea.sflag [#allocation6], %s207
        %s209 = sand.u32 %s70, 1
        %s210 = smul.addr %s209, 512
        %s211 = scalar_lea.vmem [#allocation5], %s210
        %p212 = pneg %p83
        %p213 = pneg %p80
        %p214 = pneg %p111
        %p215 = pneg %p108
        %s216 = sand.u32 %s98, 1
        %s217 = scalar_lea.sflag [#allocation4], %s216
        %s218 = sand.u32 %s98, 1
        %s219 = smul.addr %s218, 512
        %s220 = scalar_lea.vmem [#allocation7], %s219
        %s221 = smul.u32 2, %s26
        %s222 = smul.u32 2, %s26
        %s223 = smul.u32 32, %s27
        %s224 = smul.u32 2, %s26
        %s225 = smul.u32 32, %s27
        %v226 = vld [vmem:[%s195] sm:$0xff]
        %v227 = vld [vmem:[%s195 + $0x8] sm:$0xff]
        %v228 = vld [vmem:[%s195 + $0x10] sm:$0xff]
        %v229 = vld [vmem:[%s195 + $0x18] sm:$0xff]
        %v230 = vld [vmem:[%s195 + $0x20] sm:$0xff]
        %v231 = vld [vmem:[%s195 + $0x28] sm:$0xff]
        %v232 = vld [vmem:[%s195 + $0x30] sm:$0xff]
        %v233 = vld [vmem:[%s195 + $0x38] sm:$0xff]
        %v234 = vld [vmem:[%s195 + $0x40] sm:$0xff]
        %v235 = vld [vmem:[%s195 + $0x48] sm:$0xff]
        %v236 = vld [vmem:[%s195 + $0x50] sm:$0xff]
        %v237 = vld [vmem:[%s195 + $0x58] sm:$0xff]
        %v238 = vld [vmem:[%s195 + $0x60] sm:$0xff]
        %v239 = vld [vmem:[%s195 + $0x68] sm:$0xff]
        %v240 = vld [vmem:[%s195 + $0x70] sm:$0xff]
        %v241 = vld [vmem:[%s195 + $0x78] sm:$0xff]
        %v242 = vld [vmem:[%s195 + $0x80] sm:$0xff]
        %v243 = vld [vmem:[%s195 + $0x88] sm:$0xff]
        %v244 = vld [vmem:[%s195 + $0x90] sm:$0xff]
        %v245 = vld [vmem:[%s195 + $0x98] sm:$0xff]
        %v246 = vld [vmem:[%s195 + $0xa0] sm:$0xff]
        %v247 = vld [vmem:[%s195 + $0xa8] sm:$0xff]
        %v248 = vld [vmem:[%s195 + $0xb0] sm:$0xff]
        %v249 = vld [vmem:[%s195 + $0xb8] sm:$0xff]
        %v250 = vld [vmem:[%s195 + $0xc0] sm:$0xff]
        %v251 = vld [vmem:[%s195 + $0xc8] sm:$0xff]
        %v252 = vld [vmem:[%s195 + $0xd0] sm:$0xff]
        %v253 = vld [vmem:[%s195 + $0xd8] sm:$0xff]
        %v254 = vld [vmem:[%s195 + $0xe0] sm:$0xff]
        %v255 = vld [vmem:[%s195 + $0xe8] sm:$0xff]
        %v256 = vld [vmem:[%s195 + $0xf0] sm:$0xff]
        %v257 = vld [vmem:[%s195 + $0xf8] sm:$0xff]
        %v258 = vld [vmem:[%s195 + $0x100] sm:$0xff]
        %v259 = vld [vmem:[%s195 + $0x108] sm:$0xff]
        %v260 = vld [vmem:[%s195 + $0x110] sm:$0xff]
        %v261 = vld [vmem:[%s195 + $0x118] sm:$0xff]
        %v262 = vld [vmem:[%s195 + $0x120] sm:$0xff]
        %v263 = vld [vmem:[%s195 + $0x128] sm:$0xff]
        %v264 = vld [vmem:[%s195 + $0x130] sm:$0xff]
        %v265 = vld [vmem:[%s195 + $0x138] sm:$0xff]
        %v266 = vld [vmem:[%s195 + $0x140] sm:$0xff]
        %v267 = vld [vmem:[%s195 + $0x148] sm:$0xff]
        %v268 = vld [vmem:[%s195 + $0x150] sm:$0xff]
        %v269 = vld [vmem:[%s195 + $0x158] sm:$0xff]
        %v270 = vld [vmem:[%s195 + $0x160] sm:$0xff]
        %v271 = vld [vmem:[%s195 + $0x168] sm:$0xff]
        %v272 = vld [vmem:[%s195 + $0x170] sm:$0xff]
        %v273 = vld [vmem:[%s195 + $0x178] sm:$0xff]
        %v274 = vld [vmem:[%s195 + $0x180] sm:$0xff]
        %v275 = vld [vmem:[%s195 + $0x188] sm:$0xff]
        %v276 = vld [vmem:[%s195 + $0x190] sm:$0xff]
        %v277 = vld [vmem:[%s195 + $0x198] sm:$0xff]
        %v278 = vld [vmem:[%s195 + $0x1a0] sm:$0xff]
        %v279 = vld [vmem:[%s195 + $0x1a8] sm:$0xff]
        %v280 = vld [vmem:[%s195 + $0x1b0] sm:$0xff]
        %v281 = vld [vmem:[%s195 + $0x1b8] sm:$0xff]
        %v282 = vld [vmem:[%s195 + $0x1c0] sm:$0xff]
        %v283 = vld [vmem:[%s195 + $0x1c8] sm:$0xff]
        %v284 = vld [vmem:[%s195 + $0x1d0] sm:$0xff]
        %v285 = vld [vmem:[%s195 + $0x1d8] sm:$0xff]
        %v286 = vld [vmem:[%s195 + $0x1e0] sm:$0xff]
        %v287 = vld [vmem:[%s195 + $0x1e8] sm:$0xff]
        %v288 = vld [vmem:[%s195 + $0x1f0] sm:$0xff]
        %v289 = vld [vmem:[%s195 + $0x1f8] sm:$0xff]
        %v290 = vld [vmem:[%s186] sm:$0xff]
        %v291 = vld [vmem:[%s186 + $0x8] sm:$0xff]
        %293 = vset.pattern.permute.xlu0 0
        %294 = vperm.xlu0 %293, %v290
        %v295 = vpop.permute.xlu0 %294
        %298 = vset.pattern.permute.xlu0 0
        %299 = vperm.xlu0 %298, %v291
        %v300 = vpop.permute.xlu0 %299
        %v302 = vmul.f32 %v226, %v295
        %v303 = vmul.f32 %v227, %v295
        %v304 = vmul.f32 %v228, %v295
        %v305 = vmul.f32 %v229, %v295
        %v306 = vmul.f32 %v230, %v295
        %v307 = vmul.f32 %v231, %v295
        %v308 = vmul.f32 %v232, %v295
        %v309 = vmul.f32 %v233, %v295
        %v310 = vmul.f32 %v234, %v295
        %v311 = vmul.f32 %v235, %v295
        %v312 = vmul.f32 %v236, %v295
        %v313 = vmul.f32 %v237, %v295
        %v314 = vmul.f32 %v238, %v295
        %v315 = vmul.f32 %v239, %v295
        %v316 = vmul.f32 %v240, %v295
        %v317 = vmul.f32 %v241, %v295
        %v318 = vmul.f32 %v242, %v295
        %v319 = vmul.f32 %v243, %v295
        %v320 = vmul.f32 %v244, %v295
        %v321 = vmul.f32 %v245, %v295
        %v322 = vmul.f32 %v246, %v295
        %v323 = vmul.f32 %v247, %v295
        %v324 = vmul.f32 %v248, %v295
        %v325 = vmul.f32 %v249, %v295
        %v326 = vmul.f32 %v250, %v295
        %v327 = vmul.f32 %v251, %v295
        %v328 = vmul.f32 %v252, %v295
        %v329 = vmul.f32 %v253, %v295
        %v330 = vmul.f32 %v254, %v295
        %v331 = vmul.f32 %v255, %v295
        %v332 = vmul.f32 %v256, %v295
        %v333 = vmul.f32 %v257, %v295
        %v334 = vmul.f32 %v258, %v300
        %v335 = vmul.f32 %v259, %v300
        %v336 = vmul.f32 %v260, %v300
        %v337 = vmul.f32 %v261, %v300
        %v338 = vmul.f32 %v262, %v300
        %v339 = vmul.f32 %v263, %v300
        %v340 = vmul.f32 %v264, %v300
        %v341 = vmul.f32 %v265, %v300
        %v342 = vmul.f32 %v266, %v300
        %v343 = vmul.f32 %v267, %v300
        %v344 = vmul.f32 %v268, %v300
        %v345 = vmul.f32 %v269, %v300
        %v346 = vmul.f32 %v270, %v300
        %v347 = vmul.f32 %v271, %v300
        %v348 = vmul.f32 %v272, %v300
        %v349 = vmul.f32 %v273, %v300
        %v350 = vmul.f32 %v274, %v300
        %v351 = vmul.f32 %v275, %v300
        %v352 = vmul.f32 %v276, %v300
        %v353 = vmul.f32 %v277, %v300
        %v354 = vmul.f32 %v278, %v300
        %v355 = vmul.f32 %v279, %v300
        %v356 = vmul.f32 %v280, %v300
        %v357 = vmul.f32 %v281, %v300
        %v358 = vmul.f32 %v282, %v300
        %v359 = vmul.f32 %v283, %v300
        %v360 = vmul.f32 %v284, %v300
        %v361 = vmul.f32 %v285, %v300
        %v362 = vmul.f32 %v286, %v300
        %v363 = vmul.f32 %v287, %v300
        %v364 = vmul.f32 %v288, %v300
        %v365 = vmul.f32 %v289, %v300
        %366 = vst [vmem:[%s220] sm:$0xff] %v302
        %367 = vst [vmem:[%s220 + $0x8] sm:$0xff] %v303
        %368 = vst [vmem:[%s220 + $0x10] sm:$0xff] %v304
        %369 = vst [vmem:[%s220 + $0x18] sm:$0xff] %v305
        %370 = vst [vmem:[%s220 + $0x20] sm:$0xff] %v306
        %371 = vst [vmem:[%s220 + $0x28] sm:$0xff] %v307
        %372 = vst [vmem:[%s220 + $0x30] sm:$0xff] %v308
        %373 = vst [vmem:[%s220 + $0x38] sm:$0xff] %v309
        %374 = vst [vmem:[%s220 + $0x40] sm:$0xff] %v310
        %375 = vst [vmem:[%s220 + $0x48] sm:$0xff] %v311
        %376 = vst [vmem:[%s220 + $0x50] sm:$0xff] %v312
        %377 = vst [vmem:[%s220 + $0x58] sm:$0xff] %v313
        %378 = vst [vmem:[%s220 + $0x60] sm:$0xff] %v314
        %379 = vst [vmem:[%s220 + $0x68] sm:$0xff] %v315
        %380 = vst [vmem:[%s220 + $0x70] sm:$0xff] %v316
        %381 = vst [vmem:[%s220 + $0x78] sm:$0xff] %v317
        %382 = vst [vmem:[%s220 + $0x80] sm:$0xff] %v318
        %383 = vst [vmem:[%s220 + $0x88] sm:$0xff] %v319
        %384 = vst [vmem:[%s220 + $0x90] sm:$0xff] %v320
        %385 = vst [vmem:[%s220 + $0x98] sm:$0xff] %v321
        %386 = vst [vmem:[%s220 + $0xa0] sm:$0xff] %v322
        %387 = vst [vmem:[%s220 + $0xa8] sm:$0xff] %v323
        %388 = vst [vmem:[%s220 + $0xb0] sm:$0xff] %v324
        %389 = vst [vmem:[%s220 + $0xb8] sm:$0xff] %v325
        %390 = vst [vmem:[%s220 + $0xc0] sm:$0xff] %v326
        %391 = vst [vmem:[%s220 + $0xc8] sm:$0xff] %v327
        %392 = vst [vmem:[%s220 + $0xd0] sm:$0xff] %v328
        %393 = vst [vmem:[%s220 + $0xd8] sm:$0xff] %v329
        %394 = vst [vmem:[%s220 + $0xe0] sm:$0xff] %v330
        %395 = vst [vmem:[%s220 + $0xe8] sm:$0xff] %v331
        %396 = vst [vmem:[%s220 + $0xf0] sm:$0xff] %v332
        %397 = vst [vmem:[%s220 + $0xf8] sm:$0xff] %v333
        %398 = vst [vmem:[%s220 + $0x100] sm:$0xff] %v334
        %399 = vst [vmem:[%s220 + $0x108] sm:$0xff] %v335
        %400 = vst [vmem:[%s220 + $0x110] sm:$0xff] %v336
        %401 = vst [vmem:[%s220 + $0x118] sm:$0xff] %v337
        %402 = vst [vmem:[%s220 + $0x120] sm:$0xff] %v338
        %403 = vst [vmem:[%s220 + $0x128] sm:$0xff] %v339
        %404 = vst [vmem:[%s220 + $0x130] sm:$0xff] %v340
        %405 = vst [vmem:[%s220 + $0x138] sm:$0xff] %v341
        %406 = vst [vmem:[%s220 + $0x140] sm:$0xff] %v342
        %407 = vst [vmem:[%s220 + $0x148] sm:$0xff] %v343
        %408 = vst [vmem:[%s220 + $0x150] sm:$0xff] %v344
        %409 = vst [vmem:[%s220 + $0x158] sm:$0xff] %v345
        %410 = vst [vmem:[%s220 + $0x160] sm:$0xff] %v346
        %411 = vst [vmem:[%s220 + $0x168] sm:$0xff] %v347
        %412 = vst [vmem:[%s220 + $0x170] sm:$0xff] %v348
        %413 = vst [vmem:[%s220 + $0x178] sm:$0xff] %v349
        %414 = vst [vmem:[%s220 + $0x180] sm:$0xff] %v350
        %415 = vst [vmem:[%s220 + $0x188] sm:$0xff] %v351
        %416 = vst [vmem:[%s220 + $0x190] sm:$0xff] %v352
        %417 = vst [vmem:[%s220 + $0x198] sm:$0xff] %v353
        %418 = vst [vmem:[%s220 + $0x1a0] sm:$0xff] %v354
        %419 = vst [vmem:[%s220 + $0x1a8] sm:$0xff] %v355
        %420 = vst [vmem:[%s220 + $0x1b0] sm:$0xff] %v356
        %421 = vst [vmem:[%s220 + $0x1b8] sm:$0xff] %v357
        %422 = vst [vmem:[%s220 + $0x1c0] sm:$0xff] %v358
        %423 = vst [vmem:[%s220 + $0x1c8] sm:$0xff] %v359
        %424 = vst [vmem:[%s220 + $0x1d0] sm:$0xff] %v360
        %425 = vst [vmem:[%s220 + $0x1d8] sm:$0xff] %v361
        %426 = vst [vmem:[%s220 + $0x1e0] sm:$0xff] %v362
        %427 = vst [vmem:[%s220 + $0x1e8] sm:$0xff] %v363
        %428 = vst [vmem:[%s220 + $0x1f0] sm:$0xff] %v364
        %429 = vst [vmem:[%s220 + $0x1f8] sm:$0xff] %v365
        %s430 = sand.u32 %s98, 1
        %s431 = scalar_lea.sflag [#allocation4], %s430
        %s432 = sand.u32 %s98, 1
        %s433 = smul.addr %s432, 512
        %s434 = scalar_lea.vmem [#allocation7], %s433
        // Predicated region
        $region37: #{tpu_custom_call.1} parent=27 // pred_check
          %p435 = pneg %p108
        $region38: #{tpu_custom_call.1} parent=27 // pred_check_branch
          %437 = sbr.rel (%p435) target = $region40
        $region39: #{tpu_custom_call.1} parent=27 // pred_region
          %s438 = smul.u32 2, %s26
          %s439 = smul.u32 32, %s27
          %s441 = ssub.s32 8192, 8192
          %442 = vsyncadd %s431, %s441
          %s443 = smul.addr %s438, 32
          %s444 = sadd.s32 %s439, %s443
          %s445 = smul.addr %s444, 128
          %s446 = scalar_lea.hbm %s2, %s445
          %s447 = sshll.u32 %s434, 4
          %s448 = int_to_ptr.vmem [resolvable:$true] %s447
          %453 = dma.vmem_to_hbm [thread:$0]  %s448, 8192, %s446, %s431, 4096, 4096, 256
        $region40: #{tpu_custom_call.1} parent=27 // pred_fallthru
          _
      $region28: #{tpu_custom_call.1} parent=5 // pred_fallthru
        _
      %p454 = scmp.le.s32.totalorder 2, %s17
      // Predicated region
      $region41: #{tpu_custom_call.1} parent=5 // pred_check
        %p455 = pneg %p454
      $region42: #{tpu_custom_call.1} parent=5 // pred_check_branch
        %457 = sbr.rel (%p455) target = $region44
      $region43: #{tpu_custom_call.1} parent=5 // pred_region
        %s458 = ssub.s32 %s17, 2
        // Predicated region
        $region45: #{tpu_custom_call.1} parent=43 // pred_check
          %p459 = pneg %p114
        $region46: #{tpu_custom_call.1} parent=43 // pred_check_branch
          %461 = sbr.rel (%p459) target = $region48
        $region47: #{tpu_custom_call.1} parent=43 // pred_region
          %s462 = sand.u32 %s99, 1
          %s463 = scalar_lea.sflag [#allocation4], %s462
          %s464 = sand.u32 %s99, 1
          %s465 = smul.addr %s464, 512
          %s466 = scalar_lea.vmem [#allocation7], %s465
          %467 = dma.done %s463, 8192
        $region48: #{tpu_custom_call.1} parent=43 // pred_fallthru
          _
      $region44: #{tpu_custom_call.1} parent=5 // pred_fallthru
        _
    $region6: #{tpu_custom_call.1} parent=1 // loop_footer
      %s21 = sadd.s32 1, %s17
    $region7: #{tpu_custom_call.1} parent=1 // loop_footer_branch
      %16 = sbr.rel target = $region3
    $region8: #{tpu_custom_call.1} parent=1 // loop_exit
      _
    %468 = vsyncpa [#allocation3], 1
    %s469 = scalar_lea.sflag [#allocation3], 1
    %470 = vsyncpa %s469, 1
    %471 = vsyncpa [#allocation6], 1
    %s472 = scalar_lea.sflag [#allocation6], 1
    %473 = vsyncpa %s472, 1
    %474 = vsyncpa [#allocation4], 1
    %s475 = scalar_lea.sflag [#allocation4], 1
    %476 = vsyncpa %s475, 1

</llo_original>
